<compile_context>
chip_gen: v7x
topology: tpu7x:2x2x1
jax: 0.10.0
libtpu: 0.0.40
codegen_flags: <defaults>
</compile_context>

<pallas_src>
import jax
import jax.numpy as jnp
from jax.experimental import pallas as pl
from jax.experimental.pallas import tpu as pltpu

HIDDEN = 32
TB = 1024          # batch tile (rows) for the tiled path; multiple of 8 sublanes


def _celu(x):
    # CELU(alpha=1): x for x>0 else exp(x)-1.
    # Single select on the VPU; exp goes to the EUP slot.
    return jnp.where(x > 0.0, x, jnp.exp(x) - 1.0)


def controller_kernel(x_ref, w1_ref, b1_ref, w2_ref, b2_ref, w3_ref, b3_ref,
                      out_ref):
    """Fused controller MLP on one batch tile (single pre-concatenated input)."""
    x = x_ref[...]
    h1 = _celu(jnp.dot(x, w1_ref[...], preferred_element_type=jnp.float32)
               + b1_ref[...])
    h2 = _celu(jnp.dot(h1, w2_ref[...], preferred_element_type=jnp.float32)
               + b2_ref[...])
    o = jnp.dot(h2, w3_ref[...], preferred_element_type=jnp.float32) + b3_ref[...]
    # Order quantities must be non-negative.
    out_ref[...] = jnp.maximum(o, 0.0)


def prepare_params(params):
    """One-time parameter prep (casts + bias reshapes), hoisted out of forward."""
    w1, b1, w2, b2, w3, b3 = params
    f32 = jnp.float32
    assert w3.shape[1] >= 2, "dual-sourcing head needs >= 2 outputs"
    return (w1.astype(f32), b1.reshape(1, -1).astype(f32),
            w2.astype(f32), b2.reshape(1, -1).astype(f32),
            w3.astype(f32), b3.reshape(1, -1).astype(f32))


def dual_sourcing_controller(current_demand, current_inventory,
                             past_regular_orders, past_expedited_orders,
                             prepared_params, time=0):
    # TODO(synk): the reference forward() is abstract (no semantics defined);
    # this implements the standard concrete neural dual-sourcing controller.
    del time
    f32 = jnp.float32
    w1, b1, w2, b2, w3, b3 = prepared_params
    n_out = w3.shape[1]
    weights = (w1, b1, w2, b2, w3, b3)

    # Single wrapper-side concat -> one lane-contiguous (B, D) input ref.
    x = jnp.concatenate(
        [current_demand.astype(f32), current_inventory.astype(f32),
         past_regular_orders.astype(f32), past_expedited_orders.astype(f32)],
        axis=-1)
    B, D = x.shape

    if B <= TB:
        # Small batch: one VMEM-resident block, no grid machinery at all.
        vmem = pl.BlockSpec(memory_space=pltpu.MemorySpace.VMEM)
        out = pl.pallas_call(
            controller_kernel,
            out_shape=jax.ShapeDtypeStruct((B, n_out), f32),
            in_specs=[vmem] * 7,
            out_specs=vmem,
        )(x, *weights)
    else:
        # Large batch: tile the batch axis; weights stay VMEM-resident across
        # tiles (constant index_map); batch axis is "parallel" for v7x megacore.
        num_tiles = pl.cdiv(B, TB)
        pad = num_tiles * TB - B
        if pad:
            # Pad only the single pre-concatenated input so every input block
            # read is in-bounds; the output keeps its true (B, n_out) shape and
            # Pallas masks the last partial block's out-of-bounds writes.
            x = jnp.pad(x, ((0, pad), (0, 0)))

        out = pl.pallas_call(
            controller_kernel,
            out_shape=jax.ShapeDtypeStruct((B, n_out), f32),
            grid=(num_tiles,),
            in_specs=[pl.BlockSpec((TB, D), lambda i: (i, 0))]
                     + [pl.BlockSpec(w.shape, lambda i: (0, 0)) for w in weights],
            out_specs=pl.BlockSpec((TB, n_out), lambda i: (i, 0)),
            compiler_params=pltpu.CompilerParams(
                dimension_semantics=("parallel",)),
        )(x, *weights)

    regular_order = out[:, 0:1]
    expedited_order = out[:, 1:2]
    return regular_order, expedited_order


if __name__ == "__main__":
    key = jax.random.PRNGKey(0)
    ks = jax.random.split(key, 8)

    B = 2          # batch of inventory systems
    L = 8          # lead-time window for past orders
    D = 2 + 2 * L  # [demand(1), inventory(1), past_regular(L), past_expedited(L)]

    current_demand = jax.random.uniform(ks[0], (B, 1), jnp.float32, 0.0, 10.0)
    current_inventory = jax.random.uniform(ks[1], (B, 1), jnp.float32, -5.0, 20.0)
    past_regular_orders = jax.random.uniform(ks[2], (B, L), jnp.float32, 0.0, 10.0)
    past_expedited_orders = jax.random.uniform(ks[3], (B, L), jnp.float32, 0.0, 10.0)

    # Deterministic synthetic parameters (not a checkpoint load).
    scale = 0.1
    w1 = scale * jax.random.normal(ks[4], (D, HIDDEN), jnp.float32)
    b1 = jnp.zeros((1, HIDDEN), jnp.float32)
    w2 = scale * jax.random.normal(ks[5], (HIDDEN, HIDDEN), jnp.float32)
    b2 = jnp.zeros((1, HIDDEN), jnp.float32)
    w3 = scale * jax.random.normal(ks[6], (HIDDEN, 2), jnp.float32)
    b3 = jnp.zeros((1, 2), jnp.float32)

    # One-time parameter preparation (hoisted out of the forward path).
    params = prepare_params((w1, b1, w2, b2, w3, b3))

    def reference(dem, inv, pr, pe):
        x = jnp.concatenate([dem, inv, pr, pe], axis=-1)
        h1 = _celu(x @ w1 + b1)
        h2 = _celu(h1 @ w2 + b2)
        o = jnp.maximum(h2 @ w3 + b3, 0.0)
        return o[:, 0:1], o[:, 1:2]

    # --- small-batch path (single VMEM block, no grid) ---
    q_r, q_e = dual_sourcing_controller(
        current_demand, current_inventory,
        past_regular_orders, past_expedited_orders, params, time=0)
    jax.block_until_ready((q_r, q_e))
    r_r, r_e = reference(current_demand, current_inventory,
                         past_regular_orders, past_expedited_orders)
    assert jnp.allclose(q_r, r_r, atol=1e-5, rtol=1e-5)
    assert jnp.allclose(q_e, r_e, atol=1e-5, rtol=1e-5)

    # --- batch-tiled path (grid over batch tiles, resident weights, ragged tail) ---
    B2 = 2500  # > TB, exercises >=2 tiles (v7x megacore) + ragged last block
    dem2 = jax.random.uniform(ks[7], (B2, 1), jnp.float32, 0.0, 10.0)
    inv2 = jax.random.uniform(ks[0], (B2, 1), jnp.float32, -5.0, 20.0)
    pr2 = jax.random.uniform(ks[1], (B2, L), jnp.float32, 0.0, 10.0)
    pe2 = jax.random.uniform(ks[2], (B2, L), jnp.float32, 0.0, 10.0)
    q_r2, q_e2 = dual_sourcing_controller(dem2, inv2, pr2, pe2, params)
    jax.block_until_ready((q_r2, q_e2))
    r_r2, r_e2 = reference(dem2, inv2, pr2, pe2)
    assert jnp.allclose(q_r2, r_r2, atol=1e-4, rtol=1e-4)
    assert jnp.allclose(q_e2, r_e2, atol=1e-4, rtol=1e-4)

    print("KERNEL_OK")
</pallas_src>

<mosaic_0001>
module attributes {stable_mosaic.version = 11 : i64} {
  func.func @controller_kernel(%arg0: memref<2x18xf32, #tpu.memory_space<vmem>>, %arg1: memref<18x32xf32, #tpu.memory_space<vmem>>, %arg2: memref<1x32xf32, #tpu.memory_space<vmem>>, %arg3: memref<32x32xf32, #tpu.memory_space<vmem>>, %arg4: memref<1x32xf32, #tpu.memory_space<vmem>>, %arg5: memref<32x2xf32, #tpu.memory_space<vmem>>, %arg6: memref<1x2xf32, #tpu.memory_space<vmem>>, %arg7: memref<2x2xf32, #tpu.memory_space<vmem>>) attributes {dimension_semantics = [], scalar_prefetch = 0 : i64, scratch_operands = 0 : i64, tpu.core_type = #tpu.core_type<tc>} {
    %c0 = arith.constant 0 : index
    %c0_0 = arith.constant 0 : index
    %0 = vector.load %arg0[%c0, %c0_0] : memref<2x18xf32, #tpu.memory_space<vmem>>, vector<2x18xf32>
    %c0_1 = arith.constant 0 : index
    %c0_2 = arith.constant 0 : index
    %1 = vector.load %arg1[%c0_1, %c0_2] : memref<18x32xf32, #tpu.memory_space<vmem>>, vector<18x32xf32>
    %cst = arith.constant dense<0.000000e+00> : vector<2x32xf32>
    %2 = tpu.matmul %0, %1, %cst {dimension_numbers = #tpu.dot_dimension_numbers<[1], [0], [0], [1], [0, 0, 1, 1], [], []>} : vector<2x18xf32>, vector<18x32xf32>, vector<2x32xf32> -> vector<2x32xf32>
    %c0_3 = arith.constant 0 : index
    %c0_4 = arith.constant 0 : index
    %3 = vector.load %arg2[%c0_3, %c0_4] : memref<1x32xf32, #tpu.memory_space<vmem>>, vector<1x32xf32>
    %4 = vector.broadcast %3 : vector<1x32xf32> to vector<2x32xf32>
    %5 = arith.addf %2, %4 : vector<2x32xf32>
    %cst_5 = arith.constant 0.000000e+00 : f32
    %6 = vector.broadcast %cst_5 : f32 to vector<2x32xf32>
    %7 = arith.cmpf ogt, %5, %6 : vector<2x32xf32>
    %8 = math.exp %5 : vector<2x32xf32>
    %cst_6 = arith.constant 1.000000e+00 : f32
    %9 = vector.broadcast %cst_6 : f32 to vector<2x32xf32>
    %10 = arith.subf %8, %9 : vector<2x32xf32>
    %11 = arith.select %7, %5, %10 : vector<2x32xi1>, vector<2x32xf32>
    %c0_7 = arith.constant 0 : index
    %c0_8 = arith.constant 0 : index
    %12 = vector.load %arg3[%c0_7, %c0_8] : memref<32x32xf32, #tpu.memory_space<vmem>>, vector<32x32xf32>
    %cst_9 = arith.constant dense<0.000000e+00> : vector<2x32xf32>
    %13 = tpu.matmul %11, %12, %cst_9 {dimension_numbers = #tpu.dot_dimension_numbers<[1], [0], [0], [1], [0, 0, 1, 1], [], []>} : vector<2x32xf32>, vector<32x32xf32>, vector<2x32xf32> -> vector<2x32xf32>
    %c0_10 = arith.constant 0 : index
    %c0_11 = arith.constant 0 : index
    %14 = vector.load %arg4[%c0_10, %c0_11] : memref<1x32xf32, #tpu.memory_space<vmem>>, vector<1x32xf32>
    %15 = vector.broadcast %14 : vector<1x32xf32> to vector<2x32xf32>
    %16 = arith.addf %13, %15 : vector<2x32xf32>
    %cst_12 = arith.constant 0.000000e+00 : f32
    %17 = vector.broadcast %cst_12 : f32 to vector<2x32xf32>
    %18 = arith.cmpf ogt, %16, %17 : vector<2x32xf32>
    %19 = math.exp %16 : vector<2x32xf32>
    %cst_13 = arith.constant 1.000000e+00 : f32
    %20 = vector.broadcast %cst_13 : f32 to vector<2x32xf32>
    %21 = arith.subf %19, %20 : vector<2x32xf32>
    %22 = arith.select %18, %16, %21 : vector<2x32xi1>, vector<2x32xf32>
    %c0_14 = arith.constant 0 : index
    %c0_15 = arith.constant 0 : index
    %23 = vector.load %arg5[%c0_14, %c0_15] : memref<32x2xf32, #tpu.memory_space<vmem>>, vector<32x2xf32>
    %cst_16 = arith.constant dense<0.000000e+00> : vector<2x2xf32>
    %24 = tpu.matmul %22, %23, %cst_16 {dimension_numbers = #tpu.dot_dimension_numbers<[1], [0], [0], [1], [0, 0, 1, 1], [], []>} : vector<2x32xf32>, vector<32x2xf32>, vector<2x2xf32> -> vector<2x2xf32>
    %c0_17 = arith.constant 0 : index
    %c0_18 = arith.constant 0 : index
    %25 = vector.load %arg6[%c0_17, %c0_18] : memref<1x2xf32, #tpu.memory_space<vmem>>, vector<1x2xf32>
    %26 = vector.broadcast %25 : vector<1x2xf32> to vector<2x2xf32>
    %27 = arith.addf %24, %26 : vector<2x2xf32>
    %cst_19 = arith.constant 0.000000e+00 : f32
    %28 = vector.broadcast %cst_19 : f32 to vector<2x2xf32>
    %29 = arith.maximumf %27, %28 : vector<2x2xf32>
    %c0_20 = arith.constant 0 : index
    %c0_21 = arith.constant 0 : index
    %30 = vector.load %arg7[%c0_20, %c0_21] : memref<2x2xf32, #tpu.memory_space<vmem>>, vector<2x2xf32>
    tpu.vector_store %arg7[%c0_20, %c0_21], %29 {strides = array<i32>} : memref<2x2xf32, #tpu.memory_space<vmem>>, vector<2x2xf32>,
    return
  }
}

</mosaic_0001>

<llo_original>
// kernel: tpu_custom_call.1
$region0: #{tpu_custom_call.1}
  #allocation0 [shape = 'u32[]', space=smem, size = 0x4, offset = 0x4, fixed_abs, tag = 'smem constant byte address 0x4 - core index']
  #allocation1 [shape = 'u32[144,128]{1,0:T(1,128)}', space=vmem, size = 0x12000, scoped, tag = 'internal scratch']
  %s0 = inlined_call_operand.vmem [shape: f32[2,18], index: 0, kind: input, shape index: {}]
  %s1 = inlined_call_operand.hbm [shape: f32[18,32], index: 1, kind: input, shape index: {}]
  %s2 = inlined_call_operand.vmem [shape: f32[1,32], index: 2, kind: input, shape index: {}]
  %s3 = inlined_call_operand.vmem [shape: f32[32,32], index: 3, kind: input, shape index: {}]
  %s4 = inlined_call_operand.vmem [shape: f32[1,32], index: 4, kind: input, shape index: {}]
  %s5 = inlined_call_operand.vmem [shape: f32[32,2], index: 5, kind: input, shape index: {}]
  %s6 = inlined_call_operand.vmem [shape: f32[1,2], index: 6, kind: input, shape index: {}]
  %s7 = inlined_call_operand.hbm [shape: f32[2,2], index: 7, kind: output, shape index: {}]
  %s8 = sld [smem:[#allocation0]]
  $region42: #{tpu_custom_call.1} parent=0
    _
  %s10 = ssub.s32 1, %s8
  %s11 = scalar_select 0, %s10, %s8
  $region1: #{tpu_custom_call.1} parent=0
    #allocation2 [shape = 'u8[12288]{0}', space=vmem, size = 0x3000, scoped, tag = 'input window, operand 1, single buffered']
    #allocation3 [shape = 's32[1]{0}', space=sflag, size = 0x4, scoped, tag = 'scoped memory for tpu_custom_call.1']
    #allocation4 [shape = 's32[1]{0}', space=sflag, size = 0x4, scoped, tag = 'scoped memory for tpu_custom_call.1']
    #allocation5 [shape = 'u8[1024]{0}', space=vmem, size = 0x400, scoped, tag = 'output window, operand 0, single buffered']
    %12 = vsyncpa [#allocation3], 0
    %13 = vsyncpa [#allocation4], 0
    // Predicated region
    $region2: #{tpu_custom_call.1} parent=1 // pred_check
      _
    $region3: #{tpu_custom_call.1} parent=1 // pred_check_branch
      %15 = sbr.rel (0) target = $region5
    $region4: #{tpu_custom_call.1} parent=1 // pred_region
      _
    $region5: #{tpu_custom_call.1} parent=1 // pred_fallthru
      _
    // Predicated region
    $region6: #{tpu_custom_call.1} parent=1 // pred_check
      _
    $region7: #{tpu_custom_call.1} parent=1 // pred_check_branch
      %17 = sbr.rel (0) target = $region9
    $region8: #{tpu_custom_call.1} parent=1 // pred_region
      %s19 = ssub.s32 384, 384
      %20 = vsyncadd [#allocation3], %s19
      %s21 = sshll.u32 [#allocation2], 4
      %s22 = int_to_ptr.vmem [resolvable:$true] %s21
      %27 = dma.hbm_to_vmem [thread:$0]  %s1, 384, %s22, [#allocation3], 128, 128, 8
    $region9: #{tpu_custom_call.1} parent=1 // pred_fallthru
      _
    // Predicated region
    $region10: #{tpu_custom_call.1} parent=1 // pred_check
      _
    $region11: #{tpu_custom_call.1} parent=1 // pred_check_branch
      %29 = sbr.rel (0) target = $region13
    $region12: #{tpu_custom_call.1} parent=1 // pred_region
      _
    $region13: #{tpu_custom_call.1} parent=1 // pred_fallthru
      _
    // Predicated region
    $region14: #{tpu_custom_call.1} parent=1 // pred_check
      _
    $region15: #{tpu_custom_call.1} parent=1 // pred_check_branch
      %31 = sbr.rel (0) target = $region17
    $region16: #{tpu_custom_call.1} parent=1 // pred_region
      _
    $region17: #{tpu_custom_call.1} parent=1 // pred_fallthru
      _
    // Predicated region
    $region18: #{tpu_custom_call.1} parent=1 // pred_check
      _
    $region19: #{tpu_custom_call.1} parent=1 // pred_check_branch
      %33 = sbr.rel (0) target = $region21
    $region20: #{tpu_custom_call.1} parent=1 // pred_region
      _
    $region21: #{tpu_custom_call.1} parent=1 // pred_fallthru
      _
    // Predicated region
    $region22: #{tpu_custom_call.1} parent=1 // pred_check
      _
    $region23: #{tpu_custom_call.1} parent=1 // pred_check_branch
      %35 = sbr.rel (0) target = $region25
    $region24: #{tpu_custom_call.1} parent=1 // pred_region
      _
    $region25: #{tpu_custom_call.1} parent=1 // pred_fallthru
      _
    // Predicated region
    $region26: #{tpu_custom_call.1} parent=1 // pred_check
      _
    $region27: #{tpu_custom_call.1} parent=1 // pred_check_branch
      %37 = sbr.rel (0) target = $region29
    $region28: #{tpu_custom_call.1} parent=1 // pred_region
      _
    $region29: #{tpu_custom_call.1} parent=1 // pred_fallthru
      _
    // Predicated region
    $region30: #{tpu_custom_call.1} parent=1 // pred_check
      _
    $region31: #{tpu_custom_call.1} parent=1 // pred_check_branch
      %39 = sbr.rel (0) target = $region33
    $region32: #{tpu_custom_call.1} parent=1 // pred_region
      %40 = dma.done [#allocation3], 384
    $region33: #{tpu_custom_call.1} parent=1 // pred_fallthru
      _
    %v41 = vld [vmem:[%s0] sm:$0x3]
    %v42 = vld [vmem:[#allocation2] sm:$0xff]
    %v43 = vld [vmem:[#allocation2 + $0x8] sm:$0xff]
    %v44 = vld [vmem:[#allocation2 + $0x10] sm:$0x3]
    %v45 = vld [vmem:[%s2] sm:$0x1]
    %v47 = vlaneseq
    %v48 = vshrl.u32 %v47, 7
    %v49 = vsub.s32 0, %v48
    %v50 = vrot.slane %v45, %v49
    %vm52 = vcmask 146432
    %v54 = vsel %vm52, %v41, 0
    %vm56 = vcmask 1041408
    %v58 = vsel %vm56, %v44, 0
    %60 = vmatprep.subr.mxu0 0.0
    %61 = vmatpush1.msra.mxu0 %v42
    %62 = vmatprep.subr.mxu0 0.0
    %63 = vmatpush1.msra.mxu0 %v43
    %64 = vmatprep.subr.mxu0 0.0
    %65 = vmatpush1.msra.mxu0 %v58
    %66 = vmatprep.subr.mxu0 0.0
    %67 = vmatpush1.msra.mxu0 0.0
    %68 = vmatprep.subr.mxu0 0.0
    %69 = vmatpush1.msra.mxu0 0.0
    %70 = vmatprep.subr.mxu0 0.0
    %71 = vmatpush1.msra.mxu0 0.0
    %72 = vmatprep.subr.mxu0 0.0
    %73 = vmatpush1.msra.mxu0 0.0
    %74 = vmatprep.subr.mxu0 0.0
    %75 = vmatpush1.msra.mxu0 0.0
    %76 = vmatprep.subr.mxu0 0.0
    %77 = vmatpush1.msra.mxu0 0.0
    %78 = vmatprep.subr.mxu0 0.0
    %79 = vmatpush1.msra.mxu0 0.0
    %80 = vmatprep.subr.mxu0 0.0
    %81 = vmatpush1.msra.mxu0 0.0
    %82 = vmatprep.subr.mxu0 0.0
    %83 = vmatpush1.msra.mxu0 0.0
    %84 = vmatprep.subr.mxu0 0.0
    %85 = vmatpush1.msra.mxu0 0.0
    %86 = vmatprep.subr.mxu0 0.0
    %87 = vmatpush1.msra.mxu0 0.0
    %88 = vmatprep.subr.mxu0 0.0
    %89 = vmatpush1.msra.mxu0 0.0
    %90 = vmatprep.subr.mxu0 0.0
    %91 = vmatpush1.msra.mxu0 0.0
    %92 = vmatprep.subr.mxu0 0.0
    %93 = vmatpush1.msra.mxu0 0.0
    %94 = vmatprep.subr.mxu0 0.0
    %95 = vmatpush1.msra.mxu0 0.0
    %96 = vmatprep.subr.mxu0 0.0
    %97 = vmatpush1.msra.mxu0 0.0
    %98 = vmatprep.subr.mxu0 0.0
    %99 = vmatpush1.msra.mxu0 0.0
    %100 = vmatprep.subr.mxu0 0.0
    %101 = vmatpush1.msra.mxu0 0.0
    %102 = vmatprep.subr.mxu0 0.0
    %103 = vmatpush1.msra.mxu0 0.0
    %104 = vmatprep.subr.mxu0 0.0
    %105 = vmatpush1.msra.mxu0 0.0
    %106 = vmatprep.subr.mxu0 0.0
    %107 = vmatpush1.msra.mxu0 0.0
    %108 = vmatprep.subr.mxu0 0.0
    %109 = vmatpush1.msra.mxu0 0.0
    %110 = vmatprep.subr.mxu0 0.0
    %111 = vmatpush1.msra.mxu0 0.0
    %112 = vmatprep.subr.mxu0 0.0
    %113 = vmatpush1.msra.mxu0 0.0
    %114 = vmatprep.subr.mxu0 0.0
    %115 = vmatpush1.msra.mxu0 0.0
    %116 = vmatprep.subr.mxu0 0.0
    %117 = vmatpush1.msra.mxu0 0.0
    %118 = vmatprep.subr.mxu0 0.0
    %119 = vmatpush1.msra.mxu0 0.0
    %120 = vmatprep.subr.mxu0 0.0
    %121 = vmatpush1.msra.mxu0 0.0
    %122 = vmatprep.subr.mxu0 0.0
    %123 = vmatpush1.msra.mxu0 0.0
    %124 = vmatprep.mubr.f32.mxu0 0.0
    %125 = vmatmul.mubr.f32.gmra.mrb[0].mxu0 %v54
    %v126 = vpop.f32.mrb[0].mxu0
    %v127 = vadd.f32 %v50, %v126
    %v128 = vpop.f32.mrb[0].mxu0
    %129 = vdwg.mxu0
    %vm130 = vcmp.gt.f32.partialorder %v127, 0.0
    %v131 = vmul.f32 %v127, 1.442695
    %v132 = vpow.pop %v131
    %v133 = vsub.f32 %v132, 1.0
    %v134 = vsel %vm130, %v127, %v133
    %v135 = vld [vmem:[%s3] sm:$0xff]
    %v136 = vld [vmem:[%s3 + $0x8] sm:$0xff]
    %v137 = vld [vmem:[%s3 + $0x10] sm:$0xff]
    %v138 = vld [vmem:[%s3 + $0x18] sm:$0xff]
    %v139 = vld [vmem:[%s4] sm:$0x1]
    %v141 = vlaneseq
    %v142 = vshrl.u32 %v141, 7
    %v143 = vsub.s32 0, %v142
    %v144 = vrot.slane %v139, %v143
    %vm146 = vcmask 261120
    %v148 = vsel %vm146, %v134, 0
    %150 = vmatprep.subr.mxu0 0.0
    %151 = vmatpush1.msra.mxu0 %v135
    %152 = vmatprep.subr.mxu0 0.0
    %153 = vmatpush1.msra.mxu0 %v136
    %154 = vmatprep.subr.mxu0 0.0
    %155 = vmatpush1.msra.mxu0 %v137
    %156 = vmatprep.subr.mxu0 0.0
    %157 = vmatpush1.msra.mxu0 %v138
    %158 = vmatprep.subr.mxu0 0.0
    %159 = vmatpush1.msra.mxu0 0.0
    %160 = vmatprep.subr.mxu0 0.0
    %161 = vmatpush1.msra.mxu0 0.0
    %162 = vmatprep.subr.mxu0 0.0
    %163 = vmatpush1.msra.mxu0 0.0
    %164 = vmatprep.subr.mxu0 0.0
    %165 = vmatpush1.msra.mxu0 0.0
    %166 = vmatprep.subr.mxu0 0.0
    %167 = vmatpush1.msra.mxu0 0.0
    %168 = vmatprep.subr.mxu0 0.0
    %169 = vmatpush1.msra.mxu0 0.0
    %170 = vmatprep.subr.mxu0 0.0
    %171 = vmatpush1.msra.mxu0 0.0
    %172 = vmatprep.subr.mxu0 0.0
    %173 = vmatpush1.msra.mxu0 0.0
    %174 = vmatprep.subr.mxu0 0.0
    %175 = vmatpush1.msra.mxu0 0.0
    %176 = vmatprep.subr.mxu0 0.0
    %177 = vmatpush1.msra.mxu0 0.0
    %178 = vmatprep.subr.mxu0 0.0
    %179 = vmatpush1.msra.mxu0 0.0
    %180 = vmatprep.subr.mxu0 0.0
    %181 = vmatpush1.msra.mxu0 0.0
    %182 = vmatprep.subr.mxu0 0.0
    %183 = vmatpush1.msra.mxu0 0.0
    %184 = vmatprep.subr.mxu0 0.0
    %185 = vmatpush1.msra.mxu0 0.0
    %186 = vmatprep.subr.mxu0 0.0
    %187 = vmatpush1.msra.mxu0 0.0
    %188 = vmatprep.subr.mxu0 0.0
    %189 = vmatpush1.msra.mxu0 0.0
    %190 = vmatprep.subr.mxu0 0.0
    %191 = vmatpush1.msra.mxu0 0.0
    %192 = vmatprep.subr.mxu0 0.0
    %193 = vmatpush1.msra.mxu0 0.0
    %194 = vmatprep.subr.mxu0 0.0
    %195 = vmatpush1.msra.mxu0 0.0
    %196 = vmatprep.subr.mxu0 0.0
    %197 = vmatpush1.msra.mxu0 0.0
    %198 = vmatprep.subr.mxu0 0.0
    %199 = vmatpush1.msra.mxu0 0.0
    %200 = vmatprep.subr.mxu0 0.0
    %201 = vmatpush1.msra.mxu0 0.0
    %202 = vmatprep.subr.mxu0 0.0
    %203 = vmatpush1.msra.mxu0 0.0
    %204 = vmatprep.subr.mxu0 0.0
    %205 = vmatpush1.msra.mxu0 0.0
    %206 = vmatprep.subr.mxu0 0.0
    %207 = vmatpush1.msra.mxu0 0.0
    %208 = vmatprep.subr.mxu0 0.0
    %209 = vmatpush1.msra.mxu0 0.0
    %210 = vmatprep.subr.mxu0 0.0
    %211 = vmatpush1.msra.mxu0 0.0
    %212 = vmatprep.subr.mxu0 0.0
    %213 = vmatpush1.msra.mxu0 0.0
    %214 = vmatprep.mubr.f32.mxu0 0.0
    %215 = vmatmul.mubr.f32.gmra.mrb[0].mxu0 %v148
    %v216 = vpop.f32.mrb[0].mxu0
    %v217 = vadd.f32 %v144, %v216
    %v218 = vpop.f32.mrb[0].mxu0
    %219 = vdwg.mxu0
    %vm220 = vcmp.gt.f32.partialorder %v217, 0.0
    %v221 = vmul.f32 %v217, 1.442695
    %v222 = vpow.pop %v221
    %v223 = vsub.f32 %v222, 1.0
    %v224 = vsel %vm220, %v217, %v223
    %v225 = vld [vmem:[%s5] sm:$0xff]
    %v226 = vld [vmem:[%s5 + $0x8] sm:$0xff]
    %v227 = vld [vmem:[%s5 + $0x10] sm:$0xff]
    %v228 = vld [vmem:[%s5 + $0x18] sm:$0xff]
    %v229 = vld [vmem:[%s6] sm:$0x1]
    %v231 = vlaneseq
    %v232 = vshrl.u32 %v231, 7
    %v233 = vsub.s32 0, %v232
    %v234 = vrot.slane %v229, %v233
    %v237 = vsel %vm146, %v224, 0
    %239 = vmatprep.subr.mxu0 0.0
    %240 = vmatpush1.msra.mxu0 %v225
    %241 = vmatprep.subr.mxu0 0.0
    %242 = vmatpush1.msra.mxu0 %v226
    %243 = vmatprep.subr.mxu0 0.0
    %244 = vmatpush1.msra.mxu0 %v227
    %245 = vmatprep.subr.mxu0 0.0
    %246 = vmatpush1.msra.mxu0 %v228
    %247 = vmatprep.subr.mxu0 0.0
    %248 = vmatpush1.msra.mxu0 0.0
    %249 = vmatprep.subr.mxu0 0.0
    %250 = vmatpush1.msra.mxu0 0.0
    %251 = vmatprep.subr.mxu0 0.0
    %252 = vmatpush1.msra.mxu0 0.0
    %253 = vmatprep.subr.mxu0 0.0
    %254 = vmatpush1.msra.mxu0 0.0
    %255 = vmatprep.subr.mxu0 0.0
    %256 = vmatpush1.msra.mxu0 0.0
    %257 = vmatprep.subr.mxu0 0.0
    %258 = vmatpush1.msra.mxu0 0.0
    %259 = vmatprep.subr.mxu0 0.0
    %260 = vmatpush1.msra.mxu0 0.0
    %261 = vmatprep.subr.mxu0 0.0
    %262 = vmatpush1.msra.mxu0 0.0
    %263 = vmatprep.subr.mxu0 0.0
    %264 = vmatpush1.msra.mxu0 0.0
    %265 = vmatprep.subr.mxu0 0.0
    %266 = vmatpush1.msra.mxu0 0.0
    %267 = vmatprep.subr.mxu0 0.0
    %268 = vmatpush1.msra.mxu0 0.0
    %269 = vmatprep.subr.mxu0 0.0
    %270 = vmatpush1.msra.mxu0 0.0
    %271 = vmatprep.subr.mxu0 0.0
    %272 = vmatpush1.msra.mxu0 0.0
    %273 = vmatprep.subr.mxu0 0.0
    %274 = vmatpush1.msra.mxu0 0.0
    %275 = vmatprep.subr.mxu0 0.0
    %276 = vmatpush1.msra.mxu0 0.0
    %277 = vmatprep.subr.mxu0 0.0
    %278 = vmatpush1.msra.mxu0 0.0
    %279 = vmatprep.subr.mxu0 0.0
    %280 = vmatpush1.msra.mxu0 0.0
    %281 = vmatprep.subr.mxu0 0.0
    %282 = vmatpush1.msra.mxu0 0.0
    %283 = vmatprep.subr.mxu0 0.0
    %284 = vmatpush1.msra.mxu0 0.0
    %285 = vmatprep.subr.mxu0 0.0
    %286 = vmatpush1.msra.mxu0 0.0
    %287 = vmatprep.subr.mxu0 0.0
    %288 = vmatpush1.msra.mxu0 0.0
    %289 = vmatprep.subr.mxu0 0.0
    %290 = vmatpush1.msra.mxu0 0.0
    %291 = vmatprep.subr.mxu0 0.0
    %292 = vmatpush1.msra.mxu0 0.0
    %293 = vmatprep.subr.mxu0 0.0
    %294 = vmatpush1.msra.mxu0 0.0
    %295 = vmatprep.subr.mxu0 0.0
    %296 = vmatpush1.msra.mxu0 0.0
    %297 = vmatprep.subr.mxu0 0.0
    %298 = vmatpush1.msra.mxu0 0.0
    %299 = vmatprep.subr.mxu0 0.0
    %300 = vmatpush1.msra.mxu0 0.0
    %301 = vmatprep.subr.mxu0 0.0
    %302 = vmatpush1.msra.mxu0 0.0
    %303 = vmatprep.mubr.f32.mxu0 0.0
    %304 = vmatmul.mubr.f32.gmra.mrb[0].mxu0 %v237
    %v305 = vpop.f32.mrb[0].mxu0
    %v306 = vadd.f32 %v234, %v305
    %v307 = vpop.f32.mrb[0].mxu0
    %308 = vdwg.mxu0
    %v309 = vmax.f32 %v306, 0.0
    %vm310 = vcmask 9216
    %311 = vst.msk [vmem:[#allocation5] sm:$0x3] %vm310, %v309
    // Predicated region
    $region34: #{tpu_custom_call.1} parent=1 // pred_check
      _
    $region35: #{tpu_custom_call.1} parent=1 // pred_check_branch
      %313 = sbr.rel (0) target = $region37
    $region36: #{tpu_custom_call.1} parent=1 // pred_region
      %s315 = ssub.s32 32, 32
      %316 = vsyncadd [#allocation4], %s315
      %s318 = sshll.u32 [#allocation5], 4
      %s319 = int_to_ptr.vmem [resolvable:$true] %s318
      %321 = dma.vmem_to_hbm [thread:$0]  %s319, 32, %s7, [#allocation4]
    $region37: #{tpu_custom_call.1} parent=1 // pred_fallthru
      _
    // Predicated region
    $region38: #{tpu_custom_call.1} parent=1 // pred_check
      _
    $region39: #{tpu_custom_call.1} parent=1 // pred_check_branch
      %323 = sbr.rel (0) target = $region41
    $region40: #{tpu_custom_call.1} parent=1 // pred_region
      %324 = dma.done [#allocation4], 32
    $region41: #{tpu_custom_call.1} parent=1 // pred_fallthru
      _
    %325 = vsyncpa [#allocation3], 1
    %326 = vsyncpa [#allocation4], 1

</llo_original>
